<compile_context>
chip_gen: v6e
topology: v6e:2x2x1
jax: 0.10.0
libtpu: 0.0.40
codegen_flags: <defaults>
</compile_context>

<pallas_src>
from functools import partial

import jax
import jax.numpy as jnp
from jax.experimental import pallas as pl
from jax.experimental.pallas import tpu as pltpu


# --------------------------------------------------------------------------- kernel

def _spectral_mul_kernel(x_ref, w_ref, o_ref, *, n_ci):
    # x_ref : (2, Bt, Ci,  Mpad)  [real, imag] spectral coeffs of one batch tile
    # w_ref : (2, Ci, Cop, Mpad)  [real, imag] weights (single block, VMEM-resident)
    # o_ref : (2, Bt, Cop, Mpad)  [real, imag] output modes
    bt, cop, mpad = o_ref.shape[1], o_ref.shape[2], o_ref.shape[3]
    acc_r = jnp.zeros((bt, cop, mpad), jnp.float32)
    acc_i = jnp.zeros((bt, cop, mpad), jnp.float32)

    # Unrolled reduction over Cin: per-iteration temporaries are only (Bt, Cop, Mpad),
    # so VMEM / vreg pressure no longer scales with Ci*Co.  All slices are static.
    # TODO(synk): for wide layers (Ci, Co >= ~128) recast this contraction as per-mode
    # MXU matmuls (3-matmul complex product) instead of the VPU multiply-accumulate.
    for ci in range(n_ci):
        xr = x_ref[0, :, ci:ci + 1, :]          # (Bt, 1, Mpad)
        xi = x_ref[1, :, ci:ci + 1, :]
        wr = w_ref[0, ci][None, :, :]           # (1, Cop, Mpad)
        wi = w_ref[1, ci][None, :, :]
        acc_r = acc_r + (xr * wr - xi * wi)
        acc_i = acc_i + (xr * wi + xi * wr)

    o_ref[0] = acc_r
    o_ref[1] = acc_i


# ------------------------------------------------------------------- VMEM budgeting

def _vmem_budget_bytes():
    """Generation-aware VMEM budget: ~75% of per-core VMEM, conservative fallback."""
    try:
        info = pltpu.get_tpu_info()
        cap = int(getattr(info, "vmem_capacity_bytes", 64 * 2**20))
    except Exception:
        cap = 64 * 2**20          # v7x has only 64 MiB per TensorCore -> safe floor
    return (cap * 3) // 4


def _block_bytes(bt, ci, cop, mpad):
    """VMEM bytes for one grid step (f32, real+imag packed)."""
    x_blk = 4 * 2 * bt * ci * mpad
    o_blk = 4 * 2 * bt * cop * mpad
    w_blk = 4 * 2 * ci * cop * mpad
    tmp = 4 * 2 * bt * cop * mpad * 3          # accumulators + per-iteration products
    # x / out are double-buffered by the BlockSpec pipeline; count weights twice too
    # (conservative: the pipeline may hold two copies even though it fetches once).
    return 2 * (x_blk + o_blk) + 2 * w_blk + tmp


def _pick_b_tile(batch, ci, cop, mpad, budget):
    """Aim for ~8 grid steps (>= 2, even when possible) and shrink until VMEM fits."""
    bt = max(1, batch // min(batch, 8))
    while batch % bt != 0:
        bt -= 1
    while bt > 1 and _block_bytes(bt, ci, cop, mpad) > budget:
        bt -= 1
        while batch % bt != 0:
            bt -= 1
    return bt


# --------------------------------------------------------------------- pallas wrapper

def _spectral_mul(xp, wp, *, b_tile=None):
    """out[b,o,m] = sum_i (xp complex)[b,i,m] * (wp complex)[i,o,m], packed layout.

    xp : (2, B, Ci, Mpad)  float32   (real/imag packed on leading axis)
    wp : (2, Ci, Cop, Mpad) float32
    returns (2, B, Cop, Mpad) float32
    """
    _, batch, ci, mpad = xp.shape
    cop = wp.shape[2]

    budget = _vmem_budget_bytes()
    if b_tile is None:
        b_tile = _pick_b_tile(batch, ci, cop, mpad, budget)
    assert batch % b_tile == 0, "batch must be divisible by the batch tile"

    need = _block_bytes(b_tile, ci, cop, mpad)
    vmem_limit = int(min(budget, max(32 * 2**20, (3 * need) // 2)))

    kernel = partial(_spectral_mul_kernel, n_ci=ci)
    return pl.pallas_call(
        kernel,
        out_shape=jax.ShapeDtypeStruct((2, batch, cop, mpad), jnp.float32),
        grid=(batch // b_tile,),
        in_specs=[
            # x: one batch-tile slab per grid step (lane-dense Mpad last).
            pl.BlockSpec((2, b_tile, ci, mpad), lambda b: (0, b, 0, 0)),
            # w: constant index_map -> DMA'd once, VMEM-resident for the whole grid.
            pl.BlockSpec((2, ci, cop, mpad), lambda b: (0, 0, 0, 0)),
        ],
        out_specs=pl.BlockSpec((2, b_tile, cop, mpad), lambda b: (0, b, 0, 0)),
        compiler_params=pltpu.CompilerParams(
            dimension_semantics=("parallel",),
            vmem_limit_bytes=vmem_limit,
        ),
    )(xp, wp)


# ------------------------------------------------------------------- packing helpers

def pack_spectral_weights(w1, w2):
    """Pack (weights1, weights2), each (Ci, Co, m1, m2) complex, into the kernel
    layout (2[real/imag], Ci, Co_pad, Mpad) float32.  Done once at init."""
    ci, co, m1, m2 = w1.shape
    co_pad = co if co % 8 == 0 else 8 * pl.cdiv(co, 8)
    m_total = 2 * m1 * m2
    mpad = 128 * pl.cdiv(m_total, 128)
    w = jnp.concatenate([w1, w2], axis=2).reshape(ci, co, m_total)   # fold regions
    wp = jnp.stack([jnp.real(w), jnp.imag(w)], axis=0).astype(jnp.float32)
    wp = jnp.pad(wp, ((0, 0), (0, 0), (0, co_pad - co), (0, mpad - m_total)))
    return wp


# ------------------------------------------------------------------------ forward

@partial(jax.jit, static_argnames=("modes1", "modes2", "out_channels"))
def _spectral_conv2d_forward(x, w_packed, *, modes1, modes2, out_channels):
    B, Ci, H, W = x.shape
    m1, m2 = modes1, modes2
    m_total = 2 * m1 * m2
    mpad = w_packed.shape[-1]

    # TODO(synk): rfft2 / irfft2 have no Pallas TPU primitive; they stay XLA ops.
    x_ft = jnp.fft.rfft2(x)                                   # (B, Ci, H, W//2+1)

    # Fold the two mode regions into one flattened, lane-padded mode axis.
    xm = jnp.concatenate([x_ft[:, :, :m1, :m2],               # low positive freqs
                          x_ft[:, :, H - m1:, :m2]], axis=2)  # low negative freqs
    xm = xm.reshape(B, Ci, m_total)
    xp = jnp.stack([jnp.real(xm), jnp.imag(xm)], axis=0).astype(jnp.float32)
    xp = jnp.pad(xp, ((0, 0),) * 3 + ((0, mpad - m_total),))  # (2, B, Ci, Mpad)

    out = _spectral_mul(xp, w_packed)                         # (2, B, Co_pad, Mpad)
    out = out[:, :, :out_channels, :m_total].reshape(2, B, out_channels, 2 * m1, m2)
    out_c = jax.lax.complex(out[0], out[1])                   # (B, Co, 2*m1, m2)

    # Sequential writes mirror the PyTorch assignment order (second write wins iff the
    # two mode regions overlap, i.e. modes1 > H//2).
    out_ft = jnp.zeros((B, out_channels, H, W // 2 + 1), jnp.complex64)
    out_ft = out_ft.at[:, :, :m1, :m2].set(out_c[:, :, :m1])
    out_ft = out_ft.at[:, :, H - m1:, :m2].set(out_c[:, :, m1:])
    return jnp.fft.irfft2(out_ft, s=(H, W))                   # (B, Co, H, W) float32


class SpectralConv2d:
    """JAX/Pallas port of the PyTorch SpectralConv2d module (NCHW input)."""

    def __init__(self, in_channels, out_channels, modes1, modes2, key):
        self.in_channels = in_channels
        self.out_channels = out_channels
        self.modes1 = modes1
        self.modes2 = modes2
        scale = 1.0 / (in_channels * out_channels)
        k1, k2, k3, k4 = jax.random.split(key, 4)
        shp = (in_channels, out_channels, modes1, modes2)
        # torch.rand(..., dtype=torch.cfloat): uniform [0,1) real & imag parts.
        self.weights1 = scale * (jax.random.uniform(k1, shp, jnp.float32)
                                 + 1j * jax.random.uniform(k2, shp, jnp.float32))
        self.weights2 = scale * (jax.random.uniform(k3, shp, jnp.float32)
                                 + 1j * jax.random.uniform(k4, shp, jnp.float32))
        # Pack constant weights into the kernel layout once (not per forward call).
        self._w_packed = jax.device_put(
            pack_spectral_weights(self.weights1, self.weights2))

    def __call__(self, x):
        return _spectral_conv2d_forward(
            x, self._w_packed,
            modes1=self.modes1, modes2=self.modes2, out_channels=self.out_channels)


# ----------------------------------------------------------------------- reference

def _reference_forward(x, w1, w2, m1, m2, out_channels):
    """Pure-JAX reference mirroring the PyTorch forward exactly."""
    B, C, H, W = x.shape
    x_ft = jnp.fft.rfft2(x)
    out_ft = jnp.zeros((B, out_channels, H, W // 2 + 1), jnp.complex64)
    out_ft = out_ft.at[:, :, :m1, :m2].set(
        jnp.einsum('bixy,ioxy->boxy', x_ft[:, :, :m1, :m2], w1))
    out_ft = out_ft.at[:, :, H - m1:, :m2].set(
        jnp.einsum('bixy,ioxy->boxy', x_ft[:, :, H - m1:, :m2], w2))
    return jnp.fft.irfft2(out_ft, s=(H, W))


if __name__ == "__main__":
    key = jax.random.PRNGKey(0)
    k_x, k_w = jax.random.split(key)

    B, Cin, Cout, H, W = 2, 4, 4, 16, 16
    modes1, modes2 = 6, 6

    x = jax.random.normal(k_x, (B, Cin, H, W), dtype=jnp.float32)

    layer = SpectralConv2d(Cin, Cout, modes1, modes2, k_w)

    out = jax.block_until_ready(layer(x))

    ref = jax.block_until_ready(
        _reference_forward(x, layer.weights1, layer.weights2, modes1, modes2, Cout))

    assert out.shape == (B, Cout, H, W)
    assert jnp.allclose(out, ref, atol=1e-5, rtol=1e-5), "mismatch vs reference"

    print("KERNEL_OK")
</pallas_src>

<mosaic_0001>
module attributes {stable_mosaic.version = 11 : i64} {
  func.func @_spectral_mul_kernel(%arg0: i32, %arg1: memref<2x1x4x128xf32, #tpu.memory_space<vmem>>, %arg2: memref<2x4x8x128xf32, #tpu.memory_space<vmem>>, %arg3: memref<2x1x8x128xf32, #tpu.memory_space<vmem>>) attributes {dimension_semantics = [#tpu.dimension_semantics<parallel>], iteration_bounds = array<i64: 2>, scalar_prefetch = 0 : i64, scratch_operands = 0 : i64, tpu.core_type = #tpu.core_type<tc>, window_params = [{transform_indices = @transform_0, window_bounds = array<i64: 2, 1, 4, 128>}, {pipeline_mode = #tpu.pipeline_mode<synchronous>, transform_indices = @transform_1, window_bounds = array<i64: 2, 4, 8, 128>}, {transform_indices = @transform_2, window_bounds = array<i64: 2, 1, 8, 128>}]} {
    %cst = arith.constant 0.000000e+00 : f32
    %0 = vector.broadcast %cst : f32 to vector<1x8x128xf32>
    %cst_0 = arith.constant 0.000000e+00 : f32
    %1 = vector.broadcast %cst_0 : f32 to vector<1x8x128xf32>
    %c0 = arith.constant 0 : index
    %c0_1 = arith.constant 0 : index
    %c0_2 = arith.constant 0 : index
    %c0_3 = arith.constant 0 : index
    %2 = vector.load %arg1[%c0, %c0_1, %c0_2, %c0_3] : memref<2x1x4x128xf32, #tpu.memory_space<vmem>>, vector<1x1x1x128xf32>
    %3 = vector.shape_cast %2 : vector<1x1x1x128xf32> to vector<1x1x128xf32>
    %c1 = arith.constant 1 : index
    %c0_4 = arith.constant 0 : index
    %c0_5 = arith.constant 0 : index
    %c0_6 = arith.constant 0 : index
    %4 = vector.load %arg1[%c1, %c0_4, %c0_5, %c0_6] : memref<2x1x4x128xf32, #tpu.memory_space<vmem>>, vector<1x1x1x128xf32>
    %5 = vector.shape_cast %4 : vector<1x1x1x128xf32> to vector<1x1x128xf32>
    %c0_7 = arith.constant 0 : index
    %c0_8 = arith.constant 0 : index
    %c0_9 = arith.constant 0 : index
    %c0_10 = arith.constant 0 : index
    %6 = vector.load %arg2[%c0_7, %c0_8, %c0_9, %c0_10] : memref<2x4x8x128xf32, #tpu.memory_space<vmem>>, vector<1x1x8x128xf32>
    %7 = vector.shape_cast %6 : vector<1x1x8x128xf32> to vector<8x128xf32>
    %8 = vector.shape_cast %7 : vector<8x128xf32> to vector<1x8x128xf32>
    %c1_11 = arith.constant 1 : index
    %c0_12 = arith.constant 0 : index
    %c0_13 = arith.constant 0 : index
    %c0_14 = arith.constant 0 : index
    %9 = vector.load %arg2[%c1_11, %c0_12, %c0_13, %c0_14] : memref<2x4x8x128xf32, #tpu.memory_space<vmem>>, vector<1x1x8x128xf32>
    %10 = vector.shape_cast %9 : vector<1x1x8x128xf32> to vector<8x128xf32>
    %11 = vector.shape_cast %10 : vector<8x128xf32> to vector<1x8x128xf32>
    %12 = vector.broadcast %3 : vector<1x1x128xf32> to vector<1x8x128xf32>
    %13 = arith.mulf %12, %8 : vector<1x8x128xf32>
    %14 = vector.broadcast %5 : vector<1x1x128xf32> to vector<1x8x128xf32>
    %15 = arith.mulf %14, %11 : vector<1x8x128xf32>
    %16 = arith.subf %13, %15 : vector<1x8x128xf32>
    %17 = arith.addf %0, %16 : vector<1x8x128xf32>
    %18 = vector.broadcast %3 : vector<1x1x128xf32> to vector<1x8x128xf32>
    %19 = arith.mulf %18, %11 : vector<1x8x128xf32>
    %20 = vector.broadcast %5 : vector<1x1x128xf32> to vector<1x8x128xf32>
    %21 = arith.mulf %20, %8 : vector<1x8x128xf32>
    %22 = arith.addf %19, %21 : vector<1x8x128xf32>
    %23 = arith.addf %1, %22 : vector<1x8x128xf32>
    %c0_15 = arith.constant 0 : index
    %c0_16 = arith.constant 0 : index
    %c1_17 = arith.constant 1 : index
    %c0_18 = arith.constant 0 : index
    %24 = vector.load %arg1[%c0_15, %c0_16, %c1_17, %c0_18] : memref<2x1x4x128xf32, #tpu.memory_space<vmem>>, vector<1x1x1x128xf32>
    %25 = vector.shape_cast %24 : vector<1x1x1x128xf32> to vector<1x1x128xf32>
    %c1_19 = arith.constant 1 : index
    %c0_20 = arith.constant 0 : index
    %c1_21 = arith.constant 1 : index
    %c0_22 = arith.constant 0 : index
    %26 = vector.load %arg1[%c1_19, %c0_20, %c1_21, %c0_22] : memref<2x1x4x128xf32, #tpu.memory_space<vmem>>, vector<1x1x1x128xf32>
    %27 = vector.shape_cast %26 : vector<1x1x1x128xf32> to vector<1x1x128xf32>
    %c0_23 = arith.constant 0 : index
    %c1_24 = arith.constant 1 : index
    %c0_25 = arith.constant 0 : index
    %c0_26 = arith.constant 0 : index
    %28 = vector.load %arg2[%c0_23, %c1_24, %c0_25, %c0_26] : memref<2x4x8x128xf32, #tpu.memory_space<vmem>>, vector<1x1x8x128xf32>
    %29 = vector.shape_cast %28 : vector<1x1x8x128xf32> to vector<8x128xf32>
    %30 = vector.shape_cast %29 : vector<8x128xf32> to vector<1x8x128xf32>
    %c1_27 = arith.constant 1 : index
    %c1_28 = arith.constant 1 : index
    %c0_29 = arith.constant 0 : index
    %c0_30 = arith.constant 0 : index
    %31 = vector.load %arg2[%c1_27, %c1_28, %c0_29, %c0_30] : memref<2x4x8x128xf32, #tpu.memory_space<vmem>>, vector<1x1x8x128xf32>
    %32 = vector.shape_cast %31 : vector<1x1x8x128xf32> to vector<8x128xf32>
    %33 = vector.shape_cast %32 : vector<8x128xf32> to vector<1x8x128xf32>
    %34 = vector.broadcast %25 : vector<1x1x128xf32> to vector<1x8x128xf32>
    %35 = arith.mulf %34, %30 : vector<1x8x128xf32>
    %36 = vector.broadcast %27 : vector<1x1x128xf32> to vector<1x8x128xf32>
    %37 = arith.mulf %36, %33 : vector<1x8x128xf32>
    %38 = arith.subf %35, %37 : vector<1x8x128xf32>
    %39 = arith.addf %17, %38 : vector<1x8x128xf32>
    %40 = vector.broadcast %25 : vector<1x1x128xf32> to vector<1x8x128xf32>
    %41 = arith.mulf %40, %33 : vector<1x8x128xf32>
    %42 = vector.broadcast %27 : vector<1x1x128xf32> to vector<1x8x128xf32>
    %43 = arith.mulf %42, %30 : vector<1x8x128xf32>
    %44 = arith.addf %41, %43 : vector<1x8x128xf32>
    %45 = arith.addf %23, %44 : vector<1x8x128xf32>
    %c0_31 = arith.constant 0 : index
    %c0_32 = arith.constant 0 : index
    %c2 = arith.constant 2 : index
    %c0_33 = arith.constant 0 : index
    %46 = vector.load %arg1[%c0_31, %c0_32, %c2, %c0_33] : memref<2x1x4x128xf32, #tpu.memory_space<vmem>>, vector<1x1x1x128xf32>
    %47 = vector.shape_cast %46 : vector<1x1x1x128xf32> to vector<1x1x128xf32>
    %c1_34 = arith.constant 1 : index
    %c0_35 = arith.constant 0 : index
    %c2_36 = arith.constant 2 : index
    %c0_37 = arith.constant 0 : index
    %48 = vector.load %arg1[%c1_34, %c0_35, %c2_36, %c0_37] : memref<2x1x4x128xf32, #tpu.memory_space<vmem>>, vector<1x1x1x128xf32>
    %49 = vector.shape_cast %48 : vector<1x1x1x128xf32> to vector<1x1x128xf32>
    %c0_38 = arith.constant 0 : index
    %c2_39 = arith.constant 2 : index
    %c0_40 = arith.constant 0 : index
    %c0_41 = arith.constant 0 : index
    %50 = vector.load %arg2[%c0_38, %c2_39, %c0_40, %c0_41] : memref<2x4x8x128xf32, #tpu.memory_space<vmem>>, vector<1x1x8x128xf32>
    %51 = vector.shape_cast %50 : vector<1x1x8x128xf32> to vector<8x128xf32>
    %52 = vector.shape_cast %51 : vector<8x128xf32> to vector<1x8x128xf32>
    %c1_42 = arith.constant 1 : index
    %c2_43 = arith.constant 2 : index
    %c0_44 = arith.constant 0 : index
    %c0_45 = arith.constant 0 : index
    %53 = vector.load %arg2[%c1_42, %c2_43, %c0_44, %c0_45] : memref<2x4x8x128xf32, #tpu.memory_space<vmem>>, vector<1x1x8x128xf32>
    %54 = vector.shape_cast %53 : vector<1x1x8x128xf32> to vector<8x128xf32>
    %55 = vector.shape_cast %54 : vector<8x128xf32> to vector<1x8x128xf32>
    %56 = vector.broadcast %47 : vector<1x1x128xf32> to vector<1x8x128xf32>
    %57 = arith.mulf %56, %52 : vector<1x8x128xf32>
    %58 = vector.broadcast %49 : vector<1x1x128xf32> to vector<1x8x128xf32>
    %59 = arith.mulf %58, %55 : vector<1x8x128xf32>
    %60 = arith.subf %57, %59 : vector<1x8x128xf32>
    %61 = arith.addf %39, %60 : vector<1x8x128xf32>
    %62 = vector.broadcast %47 : vector<1x1x128xf32> to vector<1x8x128xf32>
    %63 = arith.mulf %62, %55 : vector<1x8x128xf32>
    %64 = vector.broadcast %49 : vector<1x1x128xf32> to vector<1x8x128xf32>
    %65 = arith.mulf %64, %52 : vector<1x8x128xf32>
    %66 = arith.addf %63, %65 : vector<1x8x128xf32>
    %67 = arith.addf %45, %66 : vector<1x8x128xf32>
    %c0_46 = arith.constant 0 : index
    %c0_47 = arith.constant 0 : index
    %c3 = arith.constant 3 : index
    %c0_48 = arith.constant 0 : index
    %68 = vector.load %arg1[%c0_46, %c0_47, %c3, %c0_48] : memref<2x1x4x128xf32, #tpu.memory_space<vmem>>, vector<1x1x1x128xf32>
    %69 = vector.shape_cast %68 : vector<1x1x1x128xf32> to vector<1x1x128xf32>
    %c1_49 = arith.constant 1 : index
    %c0_50 = arith.constant 0 : index
    %c3_51 = arith.constant 3 : index
    %c0_52 = arith.constant 0 : index
    %70 = vector.load %arg1[%c1_49, %c0_50, %c3_51, %c0_52] : memref<2x1x4x128xf32, #tpu.memory_space<vmem>>, vector<1x1x1x128xf32>
    %71 = vector.shape_cast %70 : vector<1x1x1x128xf32> to vector<1x1x128xf32>
    %c0_53 = arith.constant 0 : index
    %c3_54 = arith.constant 3 : index
    %c0_55 = arith.constant 0 : index
    %c0_56 = arith.constant 0 : index
    %72 = vector.load %arg2[%c0_53, %c3_54, %c0_55, %c0_56] : memref<2x4x8x128xf32, #tpu.memory_space<vmem>>, vector<1x1x8x128xf32>
    %73 = vector.shape_cast %72 : vector<1x1x8x128xf32> to vector<8x128xf32>
    %74 = vector.shape_cast %73 : vector<8x128xf32> to vector<1x8x128xf32>
    %c1_57 = arith.constant 1 : index
    %c3_58 = arith.constant 3 : index
    %c0_59 = arith.constant 0 : index
    %c0_60 = arith.constant 0 : index
    %75 = vector.load %arg2[%c1_57, %c3_58, %c0_59, %c0_60] : memref<2x4x8x128xf32, #tpu.memory_space<vmem>>, vector<1x1x8x128xf32>
    %76 = vector.shape_cast %75 : vector<1x1x8x128xf32> to vector<8x128xf32>
    %77 = vector.shape_cast %76 : vector<8x128xf32> to vector<1x8x128xf32>
    %78 = vector.broadcast %69 : vector<1x1x128xf32> to vector<1x8x128xf32>
    %79 = arith.mulf %78, %74 : vector<1x8x128xf32>
    %80 = vector.broadcast %71 : vector<1x1x128xf32> to vector<1x8x128xf32>
    %81 = arith.mulf %80, %77 : vector<1x8x128xf32>
    %82 = arith.subf %79, %81 : vector<1x8x128xf32>
    %83 = arith.addf %61, %82 : vector<1x8x128xf32>
    %84 = vector.broadcast %69 : vector<1x1x128xf32> to vector<1x8x128xf32>
    %85 = arith.mulf %84, %77 : vector<1x8x128xf32>
    %86 = vector.broadcast %71 : vector<1x1x128xf32> to vector<1x8x128xf32>
    %87 = arith.mulf %86, %74 : vector<1x8x128xf32>
    %88 = arith.addf %85, %87 : vector<1x8x128xf32>
    %89 = arith.addf %67, %88 : vector<1x8x128xf32>
    %c0_61 = arith.constant 0 : index
    %c0_62 = arith.constant 0 : index
    %c0_63 = arith.constant 0 : index
    %c0_64 = arith.constant 0 : index
    %90 = vector.load %arg3[%c0_61, %c0_62, %c0_63, %c0_64] : memref<2x1x8x128xf32, #tpu.memory_space<vmem>>, vector<1x1x8x128xf32>
    %91 = vector.shape_cast %90 : vector<1x1x8x128xf32> to vector<1x8x128xf32>
    %92 = vector.shape_cast %83 : vector<1x8x128xf32> to vector<1x1x8x128xf32>
    tpu.vector_store %arg3[%c0_61, %c0_62, %c0_63, %c0_64], %92 {strides = array<i32>} : memref<2x1x8x128xf32, #tpu.memory_space<vmem>>, vector<1x1x8x128xf32>,
    %c1_65 = arith.constant 1 : index
    %c0_66 = arith.constant 0 : index
    %c0_67 = arith.constant 0 : index
    %c0_68 = arith.constant 0 : index
    %93 = vector.load %arg3[%c1_65, %c0_66, %c0_67, %c0_68] : memref<2x1x8x128xf32, #tpu.memory_space<vmem>>, vector<1x1x8x128xf32>
    %94 = vector.shape_cast %93 : vector<1x1x8x128xf32> to vector<1x8x128xf32>
    %95 = vector.shape_cast %89 : vector<1x8x128xf32> to vector<1x1x8x128xf32>
    tpu.vector_store %arg3[%c1_65, %c0_66, %c0_67, %c0_68], %95 {strides = array<i32>} : memref<2x1x8x128xf32, #tpu.memory_space<vmem>>, vector<1x1x8x128xf32>,
    return
  }
  func.func @transform_0(%arg0: i32) -> (i32, i32, i32, i32) {
    %c0_i32 = arith.constant 0 : i32
    %c0_i32_0 = arith.constant 0 : i32
    %c0_i32_1 = arith.constant 0 : i32
    %c0_i32_2 = arith.constant 0 : i32
    return %c0_i32, %arg0, %c0_i32_0, %c0_i32_1 : i32, i32, i32, i32
  }
  func.func @transform_1(%arg0: i32) -> (i32, i32, i32, i32) {
    %c0_i32 = arith.constant 0 : i32
    %c0_i32_0 = arith.constant 0 : i32
    %c0_i32_1 = arith.constant 0 : i32
    %c0_i32_2 = arith.constant 0 : i32
    %c0_i32_3 = arith.constant 0 : i32
    return %c0_i32, %c0_i32_0, %c0_i32_1, %c0_i32_2 : i32, i32, i32, i32
  }
  func.func @transform_2(%arg0: i32) -> (i32, i32, i32, i32) {
    %c0_i32 = arith.constant 0 : i32
    %c0_i32_0 = arith.constant 0 : i32
    %c0_i32_1 = arith.constant 0 : i32
    %c0_i32_2 = arith.constant 0 : i32
    return %c0_i32, %arg0, %c0_i32_0, %c0_i32_1 : i32, i32, i32, i32
  }
}

</mosaic_0001>

<llo_original>
// kernel: squeeze.2
$region0: #{squeeze.2}
  %s0 = inlined_call_operand.vmem [shape: f32[1,2,4,72], index: 0, kind: input, shape index: {}]
  %s1 = inlined_call_operand.vmem [shape: f32[2,4,12,6], index: 1, kind: output, shape index: {}]
  $region1: #{squeeze.2} parent=0
    #allocation0 [shape = 'u8[8192]{0}', space=vmem, size = 0x2000, scoped, tag = 'scoped mem for input reshape']
    %s3 = sshll.u32 1, 4
    %s4 = ssub.s32 %s3, 1
    %s5 = scalar_lea.vmem %s0, 4
    %v6 = vld [vmem:[%s5] sm:%s4]
    %s7 = scalar_lea.vmem [#allocation0], 8
    %8 = vst [vmem:[%s7] sm:%s4] %v6
    %v9 = vld [vmem:[%s0] sm:%s4]
    %10 = vst [vmem:[#allocation0] sm:%s4] %v9
    %v11 = vld [vmem:[#allocation0] sm:$0xf]
    %vm12 = vcmask 48128
    %13 = vst.msk [vmem:[%s1] ss:$16 sm:$0x3] %vm12, %v11
    %14 = vst.msk [vmem:[%s1] ss:$16 sm:$0xc] %vm12, %v11
    %s15 = scalar_lea.vmem [#allocation0], 8
    %v16 = vld [vmem:[%s15] sm:$0xf]
    %vm17 = vcmask 48128
    %s18 = scalar_lea.vmem %s1, 64
    %19 = vst.msk [vmem:[%s18] ss:$16 sm:$0x3] %vm17, %v16
    %s20 = scalar_lea.vmem %s1, 64
    %21 = vst.msk [vmem:[%s20] ss:$16 sm:$0xc] %vm17, %v16
    %v22 = vld.sshfl [vmem:[#allocation0] sm:$0xff pattern:$0xba983210]
    %23 = vrot.lane.b32.xlu0 %v22, 122
    %v24 = vpop.permute.xlu0 %23
    %vm25 = vcmask 48128
    %s26 = scalar_lea.vmem %s1, 1
    %27 = vst.msk [vmem:[%s26] ss:$16 sm:$0x3] %vm25, %v24
    %s28 = scalar_lea.vmem %s1, 1
    %29 = vst.msk [vmem:[%s28] ss:$16 sm:$0xc] %vm25, %v24
    %s30 = scalar_lea.vmem %s1, 1
    %31 = vst.msk [vmem:[%s30] ss:$16 sm:$0x30] %vm25, %v24
    %s32 = scalar_lea.vmem %s1, 1
    %33 = vst.msk [vmem:[%s32] ss:$16 sm:$0xc0] %vm25, %v24
    %v34 = vld.sshfl [vmem:[#allocation0] sm:$0xff pattern:$0xba983210]
    %35 = vrot.lane.b32.xlu0 %v34, 116
    %v36 = vpop.permute.xlu0 %35
    %vm37 = vcmask 48128
    %s38 = scalar_lea.vmem %s1, 2
    %39 = vst.msk [vmem:[%s38] ss:$16 sm:$0x3] %vm37, %v36
    %s40 = scalar_lea.vmem %s1, 2
    %41 = vst.msk [vmem:[%s40] ss:$16 sm:$0xc] %vm37, %v36
    %s42 = scalar_lea.vmem %s1, 2
    %43 = vst.msk [vmem:[%s42] ss:$16 sm:$0x30] %vm37, %v36
    %s44 = scalar_lea.vmem %s1, 2
    %45 = vst.msk [vmem:[%s44] ss:$16 sm:$0xc0] %vm37, %v36
    %v46 = vld.sshfl [vmem:[#allocation0] sm:$0xff pattern:$0xba983210]
    %47 = vrot.lane.b32.xlu0 %v46, 110
    %v48 = vpop.permute.xlu0 %47
    %vm49 = vcmask 48128
    %s50 = scalar_lea.vmem %s1, 3
    %51 = vst.msk [vmem:[%s50] ss:$16 sm:$0x3] %vm49, %v48
    %s52 = scalar_lea.vmem %s1, 3
    %53 = vst.msk [vmem:[%s52] ss:$16 sm:$0xc] %vm49, %v48
    %s54 = scalar_lea.vmem %s1, 3
    %55 = vst.msk [vmem:[%s54] ss:$16 sm:$0x30] %vm49, %v48
    %s56 = scalar_lea.vmem %s1, 3
    %57 = vst.msk [vmem:[%s56] ss:$16 sm:$0xc0] %vm49, %v48
    %v58 = vld.sshfl [vmem:[#allocation0] sm:$0xff pattern:$0xba983210]
    %59 = vrot.lane.b32.xlu0 %v58, 104
    %v60 = vpop.permute.xlu0 %59
    %vm61 = vcmask 48128
    %s62 = scalar_lea.vmem %s1, 4
    %63 = vst.msk [vmem:[%s62] ss:$16 sm:$0x3] %vm61, %v60
    %s64 = scalar_lea.vmem %s1, 4
    %65 = vst.msk [vmem:[%s64] ss:$16 sm:$0xc] %vm61, %v60
    %s66 = scalar_lea.vmem %s1, 4
    %67 = vst.msk [vmem:[%s66] ss:$16 sm:$0x30] %vm61, %v60
    %s68 = scalar_lea.vmem %s1, 4
    %69 = vst.msk [vmem:[%s68] ss:$16 sm:$0xc0] %vm61, %v60
    %v70 = vld.sshfl [vmem:[#allocation0] sm:$0xff pattern:$0xba983210]
    %71 = vrot.lane.b32.xlu0 %v70, 98
    %v72 = vpop.permute.xlu0 %71
    %vm73 = vcmask 48128
    %s74 = scalar_lea.vmem %s1, 5
    %75 = vst.msk [vmem:[%s74] ss:$16 sm:$0x3] %vm73, %v72
    %s76 = scalar_lea.vmem %s1, 5
    %77 = vst.msk [vmem:[%s76] ss:$16 sm:$0xc] %vm73, %v72
    %s78 = scalar_lea.vmem %s1, 5
    %79 = vst.msk [vmem:[%s78] ss:$16 sm:$0x30] %vm73, %v72
    %s80 = scalar_lea.vmem %s1, 5
    %81 = vst.msk [vmem:[%s80] ss:$16 sm:$0xc0] %vm73, %v72
    %v82 = vld.sshfl [vmem:[#allocation0] sm:$0xff pattern:$0xba983210]
    %83 = vrot.lane.b32.xlu0 %v82, 92
    %v84 = vpop.permute.xlu0 %83
    %vm85 = vcmask 48128
    %s86 = scalar_lea.vmem %s1, 6
    %87 = vst.msk [vmem:[%s86] ss:$16 sm:$0x3] %vm85, %v84
    %s88 = scalar_lea.vmem %s1, 6
    %89 = vst.msk [vmem:[%s88] ss:$16 sm:$0xc] %vm85, %v84
    %s90 = scalar_lea.vmem %s1, 6
    %91 = vst.msk [vmem:[%s90] ss:$16 sm:$0x30] %vm85, %v84
    %s92 = scalar_lea.vmem %s1, 6
    %93 = vst.msk [vmem:[%s92] ss:$16 sm:$0xc0] %vm85, %v84
    %v94 = vld.sshfl [vmem:[#allocation0] sm:$0xff pattern:$0xba983210]
    %95 = vrot.lane.b32.xlu0 %v94, 86
    %v96 = vpop.permute.xlu0 %95
    %vm97 = vcmask 48128
    %s98 = scalar_lea.vmem %s1, 7
    %99 = vst.msk [vmem:[%s98] ss:$16 sm:$0x3] %vm97, %v96
    %s100 = scalar_lea.vmem %s1, 7
    %101 = vst.msk [vmem:[%s100] ss:$16 sm:$0xc] %vm97, %v96
    %s102 = scalar_lea.vmem %s1, 7
    %103 = vst.msk [vmem:[%s102] ss:$16 sm:$0x30] %vm97, %v96
    %s104 = scalar_lea.vmem %s1, 7
    %105 = vst.msk [vmem:[%s104] ss:$16 sm:$0xc0] %vm97, %v96
    %v106 = vld.sshfl [vmem:[#allocation0] sm:$0xff pattern:$0xba983210]
    %107 = vrot.lane.b32.xlu0 %v106, 80
    %v108 = vpop.permute.xlu0 %107
    %vm109 = vcmask 48128
    %s110 = scalar_lea.vmem %s1, 8
    %111 = vst.msk [vmem:[%s110] ss:$16 sm:$0x3] %vm109, %v108
    %s112 = scalar_lea.vmem %s1, 8
    %113 = vst.msk [vmem:[%s112] ss:$16 sm:$0xc] %vm109, %v108
    %s114 = scalar_lea.vmem %s1, 8
    %115 = vst.msk [vmem:[%s114] ss:$16 sm:$0x30] %vm109, %v108
    %s116 = scalar_lea.vmem %s1, 8
    %117 = vst.msk [vmem:[%s116] ss:$16 sm:$0xc0] %vm109, %v108
    %v118 = vld.sshfl [vmem:[#allocation0] sm:$0xff pattern:$0xba983210]
    %119 = vrot.lane.b32.xlu0 %v118, 74
    %v120 = vpop.permute.xlu0 %119
    %vm121 = vcmask 48128
    %s122 = scalar_lea.vmem %s1, 9
    %123 = vst.msk [vmem:[%s122] ss:$16 sm:$0x3] %vm121, %v120
    %s124 = scalar_lea.vmem %s1, 9
    %125 = vst.msk [vmem:[%s124] ss:$16 sm:$0xc] %vm121, %v120
    %s126 = scalar_lea.vmem %s1, 9
    %127 = vst.msk [vmem:[%s126] ss:$16 sm:$0x30] %vm121, %v120
    %s128 = scalar_lea.vmem %s1, 9
    %129 = vst.msk [vmem:[%s128] ss:$16 sm:$0xc0] %vm121, %v120
    %v130 = vld.sshfl [vmem:[#allocation0] sm:$0xff pattern:$0xba983210]
    %131 = vrot.lane.b32.xlu0 %v130, 68
    %v132 = vpop.permute.xlu0 %131
    %vm133 = vcmask 48128
    %s134 = scalar_lea.vmem %s1, 10
    %135 = vst.msk [vmem:[%s134] ss:$16 sm:$0x3] %vm133, %v132
    %s136 = scalar_lea.vmem %s1, 10
    %137 = vst.msk [vmem:[%s136] ss:$16 sm:$0xc] %vm133, %v132
    %s138 = scalar_lea.vmem %s1, 10
    %139 = vst.msk [vmem:[%s138] ss:$16 sm:$0x30] %vm133, %v132
    %s140 = scalar_lea.vmem %s1, 10
    %141 = vst.msk [vmem:[%s140] ss:$16 sm:$0xc0] %vm133, %v132
    %v142 = vld.sshfl [vmem:[#allocation0] sm:$0xff pattern:$0xba983210]
    %143 = vrot.lane.b32.xlu0 %v142, 62
    %v144 = vpop.permute.xlu0 %143
    %vm145 = vcmask 48128
    %s146 = scalar_lea.vmem %s1, 11
    %147 = vst.msk [vmem:[%s146] ss:$16 sm:$0x3] %vm145, %v144
    %s148 = scalar_lea.vmem %s1, 11
    %149 = vst.msk [vmem:[%s148] ss:$16 sm:$0xc] %vm145, %v144
    %s150 = scalar_lea.vmem %s1, 11
    %151 = vst.msk [vmem:[%s150] ss:$16 sm:$0x30] %vm145, %v144
    %s152 = scalar_lea.vmem %s1, 11
    %153 = vst.msk [vmem:[%s152] ss:$16 sm:$0xc0] %vm145, %v144

// kernel: reverse.1
$region0: #{reverse.1}
  %s0 = inlined_call_operand.vmem [shape: f32[2,4,16,7], index: 0, kind: input, shape index: {}]
  %s1 = inlined_call_operand.vmem [shape: f32[2,4,16,7], index: 1, kind: output, shape index: {}]
  $region1: #{reverse.1} parent=0
    #allocation0 [shape = 'u8[65536]{0}', space=vmem, size = 0x10000, scoped, tag = 'operand span for operand 0']
    #allocation1 [shape = 'u8[32768]{0}', space=vmem, size = 0x8000, scoped, tag = 'operand span for operand 1']
    %s2 = scalar_lea.vmem [#allocation0], 8
    // Predicated region
    $region2: #{reverse.1} parent=1 // pred_check
      _
    $region3: #{reverse.1} parent=1 // pred_check_branch
      %4 = sbr.rel (0) target = $region5
    $region4: #{reverse.1} parent=1 // pred_region
      // Predicated region
      $region6: #{reverse.1} parent=4 // pred_check
        _
      $region7: #{reverse.1} parent=4 // pred_check_branch
        %6 = sbr.rel (0) target = $region9
      $region8: #{reverse.1} parent=4 // pred_region
        // Predicated region
        $region21: #{reverse.1} parent=8 // pred_check
          _
        $region22: #{reverse.1} parent=8 // pred_check_branch
          %36 = sbr.rel (0) target = $region24
        $region23: #{reverse.1} parent=8 // pred_region
          loop: start=0, step=1, limit=1
          $region25: #{reverse.1} parent=23 // loop_pre_header
            _
          $region26: #{reverse.1} parent=23 // loop_header
            %s38 = sphi 0, %s42
            %p39 = scmp.ge.s32.totalorder %s38, 1
            %s43 = sphi %s0, %s0
            %s44 = sphi %s2, %s2
          $region27: #{reverse.1} parent=23 // loop_header_branch
            %41 = sbr.rel (%p39) target = $region31
          $region28: #{reverse.1} parent=23 // loop_body
            %v45 = vld [vmem:[%s43] sm:$0xff]
            %46 = vst [vmem:[%s44] sm:$0xff] %v45
            %v47 = vld [vmem:[%s43 + $0x8] sm:$0xff]
            %48 = vst [vmem:[%s44 + $0x10] sm:$0xff] %v47
            %v49 = vld [vmem:[%s43 + $0x10] sm:$0xff]
            %50 = vst [vmem:[%s44 + $0x20] sm:$0xff] %v49
            %v51 = vld [vmem:[%s43 + $0x18] sm:$0xff]
            %52 = vst [vmem:[%s44 + $0x30] sm:$0xff] %v51
            %v53 = vld [vmem:[%s43 + $0x20] sm:$0xff]
            %54 = vst [vmem:[%s44 + $0x40] sm:$0xff] %v53
            %v55 = vld [vmem:[%s43 + $0x28] sm:$0xff]
            %56 = vst [vmem:[%s44 + $0x50] sm:$0xff] %v55
            %v57 = vld [vmem:[%s43 + $0x30] sm:$0xff]
            %58 = vst [vmem:[%s44 + $0x60] sm:$0xff] %v57
            %v59 = vld [vmem:[%s43 + $0x38] sm:$0xff]
            %60 = vst [vmem:[%s44 + $0x70] sm:$0xff] %v59
          $region29: #{reverse.1} parent=23 // loop_footer
            %s42 = sadd.s32 1, %s38
          $region30: #{reverse.1} parent=23 // loop_footer_branch
            %37 = sbr.rel target = $region26
          $region31: #{reverse.1} parent=23 // loop_exit
            _
        $region24: #{reverse.1} parent=8 // pred_fallthru
          _
        // Predicated region
        $region32: #{reverse.1} parent=8 // pred_check
          _
        $region33: #{reverse.1} parent=8 // pred_check_branch
          %62 = sbr.rel target = $region35
        $region34: #{reverse.1} parent=8 // pred_region
          _
        $region35: #{reverse.1} parent=8 // pred_fallthru
          _
      $region9: #{reverse.1} parent=4 // pred_fallthru
        _
      // Predicated region
      $region10: #{reverse.1} parent=4 // pred_check
        _
      $region11: #{reverse.1} parent=4 // pred_check_branch
        %8 = sbr.rel target = $region13
      $region12: #{reverse.1} parent=4 // pred_region
        %s10 = ssub.s32 256, 1
        loop: start=0, step=1, limit=1
        $region14: #{reverse.1} parent=12 // loop_pre_header
          _
        $region15: #{reverse.1} parent=12 // loop_header
          %s12 = sphi 0, %s16
          %p13 = scmp.ge.s32.totalorder %s12, 1
          %s17 = sphi %s0, %s0
          %s18 = sphi %s2, %s2
        $region16: #{reverse.1} parent=12 // loop_header_branch
          %15 = sbr.rel (%p13) target = $region20
        $region17: #{reverse.1} parent=12 // loop_body
          %v19 = vld [vmem:[%s17] sm:%s10]
          %20 = vst [vmem:[%s18] sm:%s10] %v19
          %v21 = vld [vmem:[%s17 + $0x8] sm:%s10]
          %22 = vst [vmem:[%s18 + $0x10] sm:%s10] %v21
          %v23 = vld [vmem:[%s17 + $0x10] sm:%s10]
          %24 = vst [vmem:[%s18 + $0x20] sm:%s10] %v23
          %v25 = vld [vmem:[%s17 + $0x18] sm:%s10]
          %26 = vst [vmem:[%s18 + $0x30] sm:%s10] %v25
          %v27 = vld [vmem:[%s17 + $0x20] sm:%s10]
          %28 = vst [vmem:[%s18 + $0x40] sm:%s10] %v27
          %v29 = vld [vmem:[%s17 + $0x28] sm:%s10]
          %30 = vst [vmem:[%s18 + $0x50] sm:%s10] %v29
          %v31 = vld [vmem:[%s17 + $0x30] sm:%s10]
          %32 = vst [vmem:[%s18 + $0x60] sm:%s10] %v31
          %v33 = vld [vmem:[%s17 + $0x38] sm:%s10]
          %34 = vst [vmem:[%s18 + $0x70] sm:%s10] %v33
        $region18: #{reverse.1} parent=12 // loop_footer
          %s16 = sadd.s32 1, %s12
        $region19: #{reverse.1} parent=12 // loop_footer_branch
          %11 = sbr.rel target = $region15
        $region20: #{reverse.1} parent=12 // loop_exit
          _
      $region13: #{reverse.1} parent=4 // pred_fallthru
        _
    $region5: #{reverse.1} parent=1 // pred_fallthru
      _
    %63 = vnop
    %s64 = scalar_lea.vmem [#allocation0], 7
    %v65 = vld [vmem:[%s64] ss:$-1 sm:$0xff]
    %v66 = vrot.slane %v65, 1
    %67 = vst [vmem:[#allocation1] sm:$0xff] %v66
    %s68 = scalar_lea.vmem [#allocation0], 8
    %s69 = scalar_lea.vmem %s68, 7 [#allocation0]
    %v70 = vld [vmem:[%s69] ss:$-1 sm:$0xff]
    %v71 = vrot.slane %v70, 1
    %v72 = vlaneseq
    %v73 = vshrl.u32 %v72, 7
    %vm74 = vcmp.lt.s32.totalorder %v73, 7
    %75 = vst.msk [vmem:[#allocation1] sm:$0xff] %vm74, %v71
    %s76 = scalar_lea.vmem [#allocation1], 8
    %s77 = scalar_lea.vmem [#allocation0], 16
    %s78 = scalar_lea.vmem %s77, 7 [#allocation0]
    %v79 = vld [vmem:[%s78] ss:$-1 sm:$0xff]
    %v80 = vrot.slane %v79, 1
    %81 = vst [vmem:[%s76] sm:$0xff] %v80
    %s82 = scalar_lea.vmem %s77, 8 [#allocation0]
    %s83 = scalar_lea.vmem %s82, 7 [#allocation0]
    %v84 = vld [vmem:[%s83] ss:$-1 sm:$0xff]
    %v85 = vrot.slane %v84, 1
    %v86 = vlaneseq
    %v87 = vshrl.u32 %v86, 7
    %vm88 = vcmp.lt.s32.totalorder %v87, 7
    %89 = vst.msk [vmem:[%s76] sm:$0xff] %vm88, %v85
    %s90 = scalar_lea.vmem [#allocation1], 16
    %s91 = scalar_lea.vmem [#allocation0], 32
    %s92 = scalar_lea.vmem %s91, 7 [#allocation0]
    %v93 = vld [vmem:[%s92] ss:$-1 sm:$0xff]
    %v94 = vrot.slane %v93, 1
    %95 = vst [vmem:[%s90] sm:$0xff] %v94
    %s96 = scalar_lea.vmem %s91, 8 [#allocation0]
    %s97 = scalar_lea.vmem %s96, 7 [#allocation0]
    %v98 = vld [vmem:[%s97] ss:$-1 sm:$0xff]
    %v99 = vrot.slane %v98, 1
    %v100 = vlaneseq
    %v101 = vshrl.u32 %v100, 7
    %vm102 = vcmp.lt.s32.totalorder %v101, 7
    %103 = vst.msk [vmem:[%s90] sm:$0xff] %vm102, %v99
    %s104 = scalar_lea.vmem [#allocation1], 24
    %s105 = scalar_lea.vmem [#allocation0], 48
    %s106 = scalar_lea.vmem %s105, 7 [#allocation0]
    %v107 = vld [vmem:[%s106] ss:$-1 sm:$0xff]
    %v108 = vrot.slane %v107, 1
    %109 = vst [vmem:[%s104] sm:$0xff] %v108
    %s110 = scalar_lea.vmem %s105, 8 [#allocation0]
    %s111 = scalar_lea.vmem %s110, 7 [#allocation0]
    %v112 = vld [vmem:[%s111] ss:$-1 sm:$0xff]
    %v113 = vrot.slane %v112, 1
    %v114 = vlaneseq
    %v115 = vshrl.u32 %v114, 7
    %vm116 = vcmp.lt.s32.totalorder %v115, 7
    %117 = vst.msk [vmem:[%s104] sm:$0xff] %vm116, %v113
    %s118 = scalar_lea.vmem [#allocation1], 32
    %s119 = scalar_lea.vmem [#allocation0], 64
    %s120 = scalar_lea.vmem %s119, 7 [#allocation0]
    %v121 = vld [vmem:[%s120] ss:$-1 sm:$0xff]
    %v122 = vrot.slane %v121, 1
    %123 = vst [vmem:[%s118] sm:$0xff] %v122
    %s124 = scalar_lea.vmem %s119, 8 [#allocation0]
    %s125 = scalar_lea.vmem %s124, 7 [#allocation0]
    %v126 = vld [vmem:[%s125] ss:$-1 sm:$0xff]
    %v127 = vrot.slane %v126, 1
    %v128 = vlaneseq
    %v129 = vshrl.u32 %v128, 7
    %vm130 = vcmp.lt.s32.totalorder %v129, 7
    %131 = vst.msk [vmem:[%s118] sm:$0xff] %vm130, %v127
    %s132 = scalar_lea.vmem [#allocation1], 40
    %s133 = scalar_lea.vmem [#allocation0], 80
    %s134 = scalar_lea.vmem %s133, 7 [#allocation0]
    %v135 = vld [vmem:[%s134] ss:$-1 sm:$0xff]
    %v136 = vrot.slane %v135, 1
    %137 = vst [vmem:[%s132] sm:$0xff] %v136
    %s138 = scalar_lea.vmem %s133, 8 [#allocation0]
    %s139 = scalar_lea.vmem %s138, 7 [#allocation0]
    %v140 = vld [vmem:[%s139] ss:$-1 sm:$0xff]
    %v141 = vrot.slane %v140, 1
    %v142 = vlaneseq
    %v143 = vshrl.u32 %v142, 7
    %vm144 = vcmp.lt.s32.totalorder %v143, 7
    %145 = vst.msk [vmem:[%s132] sm:$0xff] %vm144, %v141
    %s146 = scalar_lea.vmem [#allocation1], 48
    %s147 = scalar_lea.vmem [#allocation0], 96
    %s148 = scalar_lea.vmem %s147, 7 [#allocation0]
    %v149 = vld [vmem:[%s148] ss:$-1 sm:$0xff]
    %v150 = vrot.slane %v149, 1
    %151 = vst [vmem:[%s146] sm:$0xff] %v150
    %s152 = scalar_lea.vmem %s147, 8 [#allocation0]
    %s153 = scalar_lea.vmem %s152, 7 [#allocation0]
    %v154 = vld [vmem:[%s153] ss:$-1 sm:$0xff]
    %v155 = vrot.slane %v154, 1
    %v156 = vlaneseq
    %v157 = vshrl.u32 %v156, 7
    %vm158 = vcmp.lt.s32.totalorder %v157, 7
    %159 = vst.msk [vmem:[%s146] sm:$0xff] %vm158, %v155
    %s160 = scalar_lea.vmem [#allocation1], 56
    %s161 = scalar_lea.vmem [#allocation0], 112
    %s162 = scalar_lea.vmem %s161, 7 [#allocation0]
    %v163 = vld [vmem:[%s162] ss:$-1 sm:$0xff]
    %v164 = vrot.slane %v163, 1
    %165 = vst [vmem:[%s160] sm:$0xff] %v164
    %s166 = scalar_lea.vmem %s161, 8 [#allocation0]
    %s167 = scalar_lea.vmem %s166, 7 [#allocation0]
    %v168 = vld [vmem:[%s167] ss:$-1 sm:$0xff]
    %v169 = vrot.slane %v168, 1
    %v170 = vlaneseq
    %v171 = vshrl.u32 %v170, 7
    %vm172 = vcmp.lt.s32.totalorder %v171, 7
    %173 = vst.msk [vmem:[%s160] sm:$0xff] %vm172, %v169
    // Predicated region
    $region36: #{reverse.1} parent=1 // pred_check
      _
    $region37: #{reverse.1} parent=1 // pred_check_branch
      %175 = sbr.rel (0) target = $region39
    $region38: #{reverse.1} parent=1 // pred_region
      // Predicated region
      $region40: #{reverse.1} parent=38 // pred_check
        _
      $region41: #{reverse.1} parent=38 // pred_check_branch
        %177 = sbr.rel (0) target = $region43
      $region42: #{reverse.1} parent=38 // pred_region
        // Predicated region
        $region55: #{reverse.1} parent=42 // pred_check
          _
        $region56: #{reverse.1} parent=42 // pred_check_branch
          %207 = sbr.rel (0) target = $region58
        $region57: #{reverse.1} parent=42 // pred_region
          loop: start=0, step=1, limit=1
          $region59: #{reverse.1} parent=57 // loop_pre_header
            _
          $region60: #{reverse.1} parent=57 // loop_header
            %s209 = sphi 0, %s213
            %p210 = scmp.ge.s32.totalorder %s209, 1
            %s214 = sphi [#allocation1], [#allocation1]
            %s215 = sphi %s1, %s1
          $region61: #{reverse.1} parent=57 // loop_header_branch
            %212 = sbr.rel (%p210) target = $region65
          $region62: #{reverse.1} parent=57 // loop_body
            %v216 = vld [vmem:[%s214] sm:$0xff]
            %217 = vst [vmem:[%s215] sm:$0xff] %v216
            %v218 = vld [vmem:[%s214 + $0x8] sm:$0xff]
            %219 = vst [vmem:[%s215 + $0x8] sm:$0xff] %v218
            %v220 = vld [vmem:[%s214 + $0x10] sm:$0xff]
            %221 = vst [vmem:[%s215 + $0x10] sm:$0xff] %v220
            %v222 = vld [vmem:[%s214 + $0x18] sm:$0xff]
            %223 = vst [vmem:[%s215 + $0x18] sm:$0xff] %v222
            %v224 = vld [vmem:[%s214 + $0x20] sm:$0xff]
            %225 = vst [vmem:[%s215 + $0x20] sm:$0xff] %v224
            %v226 = vld [vmem:[%s214 + $0x28] sm:$0xff]
            %227 = vst [vmem:[%s215 + $0x28] sm:$0xff] %v226
            %v228 = vld [vmem:[%s214 + $0x30] sm:$0xff]
            %229 = vst [vmem:[%s215 + $0x30] sm:$0xff] %v228
            %v230 = vld [vmem:[%s214 + $0x38] sm:$0xff]
            %231 = vst [vmem:[%s215 + $0x38] sm:$0xff] %v230
          $region63: #{reverse.1} parent=57 // loop_footer
            %s213 = sadd.s32 1, %s209
          $region64: #{reverse.1} parent=57 // loop_footer_branch
            %208 = sbr.rel target = $region60
          $region65: #{reverse.1} parent=57 // loop_exit
            _
        $region58: #{reverse.1} parent=42 // pred_fallthru
          _
        // Predicated region
        $region66: #{reverse.1} parent=42 // pred_check
          _
        $region67: #{reverse.1} parent=42 // pred_check_branch
          %233 = sbr.rel target = $region69
        $region68: #{reverse.1} parent=42 // pred_region
          _
        $region69: #{reverse.1} parent=42 // pred_fallthru
          _
      $region43: #{reverse.1} parent=38 // pred_fallthru
        _
      // Predicated region
      $region44: #{reverse.1} parent=38 // pred_check
        _
      $region45: #{reverse.1} parent=38 // pred_check_branch
        %179 = sbr.rel target = $region47
      $region46: #{reverse.1} parent=38 // pred_region
        %s181 = ssub.s32 256, 1
        loop: start=0, step=1, limit=1
        $region48: #{reverse.1} parent=46 // loop_pre_header
          _
        $region49: #{reverse.1} parent=46 // loop_header
          %s183 = sphi 0, %s187
          %p184 = scmp.ge.s32.totalorder %s183, 1
          %s188 = sphi [#allocation1], [#allocation1]
          %s189 = sphi %s1, %s1
        $region50: #{reverse.1} parent=46 // loop_header_branch
          %186 = sbr.rel (%p184) target = $region54
        $region51: #{reverse.1} parent=46 // loop_body
          %v190 = vld [vmem:[%s188] sm:%s181]
          %191 = vst [vmem:[%s189] sm:%s181] %v190
          %v192 = vld [vmem:[%s188 + $0x8] sm:%s181]
          %193 = vst [vmem:[%s189 + $0x8] sm:%s181] %v192
          %v194 = vld [vmem:[%s188 + $0x10] sm:%s181]
          %195 = vst [vmem:[%s189 + $0x10] sm:%s181] %v194
          %v196 = vld [vmem:[%s188 + $0x18] sm:%s181]
          %197 = vst [vmem:[%s189 + $0x18] sm:%s181] %v196
          %v198 = vld [vmem:[%s188 + $0x20] sm:%s181]
          %199 = vst [vmem:[%s189 + $0x20] sm:%s181] %v198
          %v200 = vld [vmem:[%s188 + $0x28] sm:%s181]
          %201 = vst [vmem:[%s189 + $0x28] sm:%s181] %v200
          %v202 = vld [vmem:[%s188 + $0x30] sm:%s181]
          %203 = vst [vmem:[%s189 + $0x30] sm:%s181] %v202
          %v204 = vld [vmem:[%s188 + $0x38] sm:%s181]
          %205 = vst [vmem:[%s189 + $0x38] sm:%s181] %v204
        $region52: #{reverse.1} parent=46 // loop_footer
          %s187 = sadd.s32 1, %s183
        $region53: #{reverse.1} parent=46 // loop_footer_branch
          %182 = sbr.rel target = $region49
        $region54: #{reverse.1} parent=46 // loop_exit
          _
      $region47: #{reverse.1} parent=38 // pred_fallthru
        _
    $region39: #{reverse.1} parent=1 // pred_fallthru
      _
    %234 = vnop

// kernel: _spectral_conv2d_forward.1
$region0: #{_spectral_conv2d_forward.1}
  #allocation0 [shape = 'u32[]', space=smem, size = 0x4, offset = 0x4, fixed_abs, tag = 'smem constant byte address 0x4 - core index']
  #allocation1 [shape = 'u32[144,128]{1,0:T(1,128)}', space=vmem, size = 0x12000, scoped, tag = 'internal scratch']
  %s0 = inlined_call_operand.vmem [shape: f32[2,2,4,128], index: 0, kind: input, shape index: {}]
  %s1 = inlined_call_operand.vmem [shape: f32[2,4,8,128], index: 1, kind: input, shape index: {}]
  %s2 = inlined_call_operand.vmem [shape: f32[2,2,8,128], index: 2, kind: output, shape index: {}]
  %s3 = sld [smem:[#allocation0]]
  $region116: #{_spectral_conv2d_forward.1} parent=0
    _
  %s5 = ssub.s32 1, %s3
  %s6 = scalar_select 0, %s5, %s3
  $region1: #{_spectral_conv2d_forward.1} parent=0
    #allocation2 [shape = 'u8[8192]{0}', space=vmem, size = 0x2000, scoped, tag = 'input window, operand 0']
    #allocation3 [shape = 'u8[16384]{0}', space=vmem, size = 0x4000, scoped, tag = 'output window, operand 0']
    loop: start=0, step=1, limit=4
    $region2: #{_spectral_conv2d_forward.1} parent=1 // loop_pre_header
      _
    $region3: #{_spectral_conv2d_forward.1} parent=1 // loop_header
      %s8 = sphi 0, %s12
      %p9 = scmp.ge.s32.totalorder %s8, 4
      %s18 = sphi 0, %s20
      %s21 = sphi 0, %s18
      %s22 = sphi 0, %s21
      %s38 = sphi 0, %s22
      %s42 = sphi 0, %s42
      %s44 = sphi 0, %s42
      %s45 = sphi 0, %s44
      %s59 = sphi 0, %s45
      %s65 = sphi 0, %s67
      %s68 = sphi 0, %s65
      %s69 = sphi 0, %s68
      %s85 = sphi 0, %s69
    $region4: #{_spectral_conv2d_forward.1} parent=1 // loop_header_branch
      %11 = sbr.rel (%p9) target = $region8
    $region5: #{_spectral_conv2d_forward.1} parent=1 // loop_body
      %s13 = ssub.s32 %s8, 1
      %s14 = ssub.s32 %s8, 2
      %s15 = sadd.s32 %s8, 1
      %s16 = ssub.s32 %s8, %s15
      %p17 = scmp.eq.s32.totalorder %s16, 0
      %s19 = sadd.s32 %s18, 1
      %s20 = scalar_select %p17, %s18, %s19
      %p23 = pneg %p17
      %p24 = scmp.eq.s32.totalorder %s8, 1
      %p25 = por %p23, %p24
      %p26 = scmp.ne.s32.totalorder %s18, %s21
      %p27 = scmp.eq.s32.totalorder %s8, 0
      %p28 = por %p26, %p27
      %p29 = scmp.ne.s32.totalorder %s18, %s21
      %p30 = scmp.eq.s32.totalorder %s13, 1
      %p31 = por %p29, %p30
      %p32 = scmp.ne.s32.totalorder %s21, %s22
      %p33 = scmp.eq.s32.totalorder %s13, 0
      %p34 = por %p32, %p33
      %p35 = scmp.ne.s32.totalorder %s21, %s22
      %p36 = scmp.eq.s32.totalorder %s14, 1
      %p37 = por %p35, %p36
      %p39 = scmp.ne.s32.totalorder %s22, %s38
      %p40 = scmp.eq.s32.totalorder %s14, 0
      %p41 = por %p39, %p40
      %s43 = sadd.s32 %s42, 1
      %p46 = scmp.eq.s32.totalorder %s8, 1
      %p47 = scmp.ne.s32.totalorder %s42, %s44
      %p48 = scmp.eq.s32.totalorder %s8, 0
      %p49 = por %p47, %p48
      %p50 = scmp.ne.s32.totalorder %s42, %s44
      %p51 = scmp.eq.s32.totalorder %s13, 1
      %p52 = por %p50, %p51
      %p53 = scmp.ne.s32.totalorder %s44, %s45
      %p54 = scmp.eq.s32.totalorder %s13, 0
      %p55 = por %p53, %p54
      %p56 = scmp.ne.s32.totalorder %s44, %s45
      %p57 = scmp.eq.s32.totalorder %s14, 1
      %p58 = por %p56, %p57
      %p60 = scmp.ne.s32.totalorder %s45, %s59
      %p61 = scmp.eq.s32.totalorder %s14, 0
      %p62 = por %p60, %p61
      %s63 = ssub.s32 %s8, %s15
      %p64 = scmp.eq.s32.totalorder %s63, 0
      %s66 = sadd.s32 %s65, 1
      %s67 = scalar_select %p64, %s65, %s66
      %p70 = pneg %p64
      %p71 = scmp.eq.s32.totalorder %s8, 1
      %p72 = por %p70, %p71
      %p73 = scmp.ne.s32.totalorder %s65, %s68
      %p74 = scmp.eq.s32.totalorder %s8, 0
      %p75 = por %p73, %p74
      %p76 = scmp.ne.s32.totalorder %s65, %s68
      %p77 = scmp.eq.s32.totalorder %s13, 1
      %p78 = por %p76, %p77
      %p79 = scmp.ne.s32.totalorder %s68, %s69
      %p80 = scmp.eq.s32.totalorder %s13, 0
      %p81 = por %p79, %p80
      %p82 = scmp.ne.s32.totalorder %s68, %s69
      %p83 = scmp.eq.s32.totalorder %s14, 1
      %p84 = por %p82, %p83
      %p86 = scmp.ne.s32.totalorder %s69, %s85
      %p87 = scmp.eq.s32.totalorder %s14, 0
      %p88 = por %p86, %p87
      %p89 = scmp.le.s32.totalorder 1, %s8
      %p90 = scmp.lt.s32.totalorder %s8, 3
      %p91 = pnand %p89, %p90
      %p92 = pneg %p91
      // Predicated region
      $region9: #{_spectral_conv2d_forward.1} parent=5 // pred_check
        _
      $region10: #{_spectral_conv2d_forward.1} parent=5 // pred_check_branch
        %94 = sbr.rel (%p91) target = $region12
      $region11: #{_spectral_conv2d_forward.1} parent=5 // pred_region
        %s95 = ssub.s32 %s8, 1
        // Predicated region
        $region13: #{_spectral_conv2d_forward.1} parent=11 // pred_check
          %p96 = pneg %p55
        $region14: #{_spectral_conv2d_forward.1} parent=11 // pred_check_branch
          %98 = sbr.rel (%p96) target = $region16
        $region15: #{_spectral_conv2d_forward.1} parent=11 // pred_region
          _
        $region16: #{_spectral_conv2d_forward.1} parent=11 // pred_fallthru
          _
      $region12: #{_spectral_conv2d_forward.1} parent=5 // pred_fallthru
        _
      %p99 = scmp.lt.s32.totalorder %s8, 2
      // Predicated region
      $region17: #{_spectral_conv2d_forward.1} parent=5 // pred_check
        %p100 = pneg %p99
      $region18: #{_spectral_conv2d_forward.1} parent=5 // pred_check_branch
        %102 = sbr.rel (%p100) target = $region20
      $region19: #{_spectral_conv2d_forward.1} parent=5 // pred_region
        // Predicated region
        $region21: #{_spectral_conv2d_forward.1} parent=19 // pred_check
          %p103 = pneg %p28
        $region22: #{_spectral_conv2d_forward.1} parent=19 // pred_check_branch
          %105 = sbr.rel (%p103) target = $region24
        $region23: #{_spectral_conv2d_forward.1} parent=19 // pred_region
          %s106 = sand.u32 %s18, 1
          %s107 = sand.u32 %s18, 1
          %s108 = smul.addr %s107, 8
          %s109 = scalar_lea.vmem [#allocation2], %s108
          %s110 = smul.addr %s8, 4
          %s111 = scalar_lea.vmem %s0, %s110
          // Predicated region
          $region25: #{_spectral_conv2d_forward.1} parent=23 // pred_check
            _
          $region26: #{_spectral_conv2d_forward.1} parent=23 // pred_check_branch
            %113 = sbr.rel (0) target = $region28
          $region27: #{_spectral_conv2d_forward.1} parent=23 // pred_region
            // Predicated region
            $region29: #{_spectral_conv2d_forward.1} parent=27 // pred_check
              _
            $region30: #{_spectral_conv2d_forward.1} parent=27 // pred_check_branch
              %115 = sbr.rel target = $region32
            $region31: #{_spectral_conv2d_forward.1} parent=27 // pred_region
              // Predicated region
              $region44: #{_spectral_conv2d_forward.1} parent=31 // pred_check
                _
              $region45: #{_spectral_conv2d_forward.1} parent=31 // pred_check_branch
                %133 = sbr.rel (0) target = $region47
              $region46: #{_spectral_conv2d_forward.1} parent=31 // pred_region
                loop: start=0, step=1, limit=1
                $region48: #{_spectral_conv2d_forward.1} parent=46 // loop_pre_header
                  _
                $region49: #{_spectral_conv2d_forward.1} parent=46 // loop_header
                  %s135 = sphi 0, %s139
                  %p136 = scmp.ge.s32.totalorder %s135, 1
                  %s140 = sphi %s111, %s111
                  %s141 = sphi %s109, %s109
                $region50: #{_spectral_conv2d_forward.1} parent=46 // loop_header_branch
                  %138 = sbr.rel (%p136) target = $region54
                $region51: #{_spectral_conv2d_forward.1} parent=46 // loop_body
                  _
                $region52: #{_spectral_conv2d_forward.1} parent=46 // loop_footer
                  %s139 = sadd.s32 1, %s135
                $region53: #{_spectral_conv2d_forward.1} parent=46 // loop_footer_branch
                  %134 = sbr.rel target = $region49
                $region54: #{_spectral_conv2d_forward.1} parent=46 // loop_exit
                  _
                %s143 = ssub.s32 16, 1
                loop: start=0, step=1, limit=1
                $region55: #{_spectral_conv2d_forward.1} parent=46 // loop_pre_header
                  _
                $region56: #{_spectral_conv2d_forward.1} parent=46 // loop_header
                  %s145 = sphi 0, %s149
                  %p146 = scmp.ge.s32.totalorder %s145, 1
                  %s150 = sphi %s111, %s111
                  %s151 = sphi %s109, %s109
                $region57: #{_spectral_conv2d_forward.1} parent=46 // loop_header_branch
                  %148 = sbr.rel (%p146) target = $region61
                $region58: #{_spectral_conv2d_forward.1} parent=46 // loop_body
                  %v152 = vld [vmem:[%s150] sm:%s143]
                  %153 = vst [vmem:[%s151] sm:%s143] %v152
                  %v154 = vld [vmem:[%s150 + $0x8] sm:%s143]
                  %155 = vst [vmem:[%s151 + $0x4] sm:%s143] %v154
                $region59: #{_spectral_conv2d_forward.1} parent=46 // loop_footer
                  %s149 = sadd.s32 1, %s145
                $region60: #{_spectral_conv2d_forward.1} parent=46 // loop_footer_branch
                  %144 = sbr.rel target = $region56
                $region61: #{_spectral_conv2d_forward.1} parent=46 // loop_exit
                  _
              $region47: #{_spectral_conv2d_forward.1} parent=31 // pred_fallthru
                _
            $region32: #{_spectral_conv2d_forward.1} parent=27 // pred_fallthru
              _
            // Predicated region
            $region33: #{_spectral_conv2d_forward.1} parent=27 // pred_check
              _
            $region34: #{_spectral_conv2d_forward.1} parent=27 // pred_check_branch
              %117 = sbr.rel (0) target = $region36
            $region35: #{_spectral_conv2d_forward.1} parent=27 // pred_region
              %s119 = ssub.s32 16, 1
              loop: start=0, step=1, limit=1
              $region37: #{_spectral_conv2d_forward.1} parent=35 // loop_pre_header
                _
              $region38: #{_spectral_conv2d_forward.1} parent=35 // loop_header
                %s121 = sphi 0, %s125
                %p122 = scmp.ge.s32.totalorder %s121, 1
                %s126 = sphi %s111, %s111
                %s127 = sphi %s109, %s109
              $region39: #{_spectral_conv2d_forward.1} parent=35 // loop_header_branch
                %124 = sbr.rel (%p122) target = $region43
              $region40: #{_spectral_conv2d_forward.1} parent=35 // loop_body
                %v128 = vld [vmem:[%s126] sm:%s119]
                %129 = vst [vmem:[%s127] sm:%s119] %v128
                %v130 = vld [vmem:[%s126 + $0x8] sm:%s119]
                %131 = vst [vmem:[%s127 + $0x4] sm:%s119] %v130
              $region41: #{_spectral_conv2d_forward.1} parent=35 // loop_footer
                %s125 = sadd.s32 1, %s121
              $region42: #{_spectral_conv2d_forward.1} parent=35 // loop_footer_branch
                %120 = sbr.rel target = $region38
              $region43: #{_spectral_conv2d_forward.1} parent=35 // loop_exit
                _
            $region36: #{_spectral_conv2d_forward.1} parent=27 // pred_fallthru
              _
          $region28: #{_spectral_conv2d_forward.1} parent=23 // pred_fallthru
            _
          %156 = vnop
        $region24: #{_spectral_conv2d_forward.1} parent=19 // pred_fallthru
          _
      $region20: #{_spectral_conv2d_forward.1} parent=5 // pred_fallthru
        _
      %p157 = scmp.le.s32.totalorder 1, %s8
      %p158 = scmp.lt.s32.totalorder %s8, 3
      %p159 = pnand %p157, %p158
      %p160 = pneg %p159
      // Predicated region
      $region62: #{_spectral_conv2d_forward.1} parent=5 // pred_check
        _
      $region63: #{_spectral_conv2d_forward.1} parent=5 // pred_check_branch
        %162 = sbr.rel (%p159) target = $region65
      $region64: #{_spectral_conv2d_forward.1} parent=5 // pred_region
        %s163 = ssub.s32 %s8, 1
        %s164 = sand.u32 %s21, 1
        %s165 = sand.u32 %s21, 1
        %s166 = smul.addr %s165, 8
        %s167 = scalar_lea.vmem [#allocation2], %s166
        // Predicated region
        $region66: #{_spectral_conv2d_forward.1} parent=64 // pred_check
          %p168 = pneg %p34
        $region67: #{_spectral_conv2d_forward.1} parent=64 // pred_check_branch
          %170 = sbr.rel (%p168) target = $region69
        $region68: #{_spectral_conv2d_forward.1} parent=64 // pred_region
          _
        $region69: #{_spectral_conv2d_forward.1} parent=64 // pred_fallthru
          _
        %s171 = sand.u32 %s21, 1
        %s172 = sand.u32 %s21, 1
        %s173 = smul.addr %s172, 8
        %s174 = scalar_lea.vmem [#allocation2], %s173
        %p175 = pneg %p34
        %p176 = pneg %p31
        %p177 = pneg %p55
        %p178 = pneg %p52
        %p179 = pneg %p81
        %p180 = pneg %p78
        %s181 = sand.u32 %s68, 1
        %s182 = sand.u32 %s68, 1
        %s183 = smul.addr %s182, 16
        %s184 = scalar_lea.vmem [#allocation3], %s183
        %v185 = vld [vmem:[%s167] sm:$0x1]
        %s186 = scalar_lea.vmem %s167, 4 [#allocation2]
        %v187 = vld [vmem:[%s186] sm:$0x1]
        %v188 = vld [vmem:[%s1] sm:$0xff]
        %s189 = scalar_lea.vmem %s1, 32
        %v190 = vld [vmem:[%s189] sm:$0xff]
        %v191 = vlaneseq
        %v192 = vshrl.u32 %v191, 7
        %v193 = vsub.s32 0, %v192
        %v194 = vrot.slane %v185, %v193
        %v195 = vmul.f32 %v194, %v188
        %v196 = vlaneseq
        %v197 = vshrl.u32 %v196, 7
        %v198 = vsub.s32 0, %v197
        %v199 = vrot.slane %v187, %v198
        %v200 = vmul.f32 %v199, %v190
        %v201 = vsub.f32 %v195, %v200
        %v202 = vadd.f32 %v201, 0.0
        %v203 = vmul.f32 %v194, %v190
        %v204 = vmul.f32 %v199, %v188
        %v205 = vadd.f32 %v203, %v204
        %v206 = vadd.f32 %v205, 0.0
        %v207 = vld [vmem:[%s167 + $0x1] sm:$0x1]
        %v208 = vld [vmem:[%s186 + $0x1] sm:$0x1]
        %s209 = scalar_lea.vmem %s1, 8
        %v210 = vld [vmem:[%s209] sm:$0xff]
        %s211 = scalar_lea.vmem %s1, 40
        %v212 = vld [vmem:[%s211] sm:$0xff]
        %v213 = vlaneseq
        %v214 = vshrl.u32 %v213, 7
        %v215 = vsub.s32 0, %v214
        %v216 = vrot.slane %v207, %v215
        %v217 = vmul.f32 %v216, %v210
        %v218 = vlaneseq
        %v219 = vshrl.u32 %v218, 7
        %v220 = vsub.s32 0, %v219
        %v221 = vrot.slane %v208, %v220
        %v222 = vmul.f32 %v221, %v212
        %v223 = vsub.f32 %v217, %v222
        %v224 = vadd.f32 %v202, %v223
        %v225 = vmul.f32 %v216, %v212
        %v226 = vmul.f32 %v221, %v210
        %v227 = vadd.f32 %v225, %v226
        %v228 = vadd.f32 %v206, %v227
        %v229 = vld [vmem:[%s167 + $0x2] sm:$0x1]
        %v230 = vld [vmem:[%s186 + $0x2] sm:$0x1]
        %s231 = scalar_lea.vmem %s1, 16
        %v232 = vld [vmem:[%s231] sm:$0xff]
        %s233 = scalar_lea.vmem %s1, 48
        %v234 = vld [vmem:[%s233] sm:$0xff]
        %v235 = vlaneseq
        %v236 = vshrl.u32 %v235, 7
        %v237 = vsub.s32 0, %v236
        %v238 = vrot.slane %v229, %v237
        %v239 = vmul.f32 %v238, %v232
        %v240 = vlaneseq
        %v241 = vshrl.u32 %v240, 7
        %v242 = vsub.s32 0, %v241
        %v243 = vrot.slane %v230, %v242
        %v244 = vmul.f32 %v243, %v234
        %v245 = vsub.f32 %v239, %v244
        %v246 = vadd.f32 %v224, %v245
        %v247 = vmul.f32 %v238, %v234
        %v248 = vmul.f32 %v243, %v232
        %v249 = vadd.f32 %v247, %v248
        %v250 = vadd.f32 %v228, %v249
        %v251 = vld [vmem:[%s167 + $0x3] sm:$0x1]
        %v252 = vld [vmem:[%s186 + $0x3] sm:$0x1]
        %s253 = scalar_lea.vmem %s1, 24
        %v254 = vld [vmem:[%s253] sm:$0xff]
        %s255 = scalar_lea.vmem %s1, 56
        %v256 = vld [vmem:[%s255] sm:$0xff]
        %v257 = vlaneseq
        %v258 = vshrl.u32 %v257, 7
        %v259 = vsub.s32 0, %v258
        %v260 = vrot.slane %v251, %v259
        %v261 = vmul.f32 %v260, %v254
        %v262 = vlaneseq
        %v263 = vshrl.u32 %v262, 7
        %v264 = vsub.s32 0, %v263
        %v265 = vrot.slane %v252, %v264
        %v266 = vmul.f32 %v265, %v256
        %v267 = vsub.f32 %v261, %v266
        %v268 = vadd.f32 %v246, %v267
        %v269 = vmul.f32 %v260, %v256
        %v270 = vmul.f32 %v265, %v254
        %v271 = vadd.f32 %v269, %v270
        %v272 = vadd.f32 %v250, %v271
        %273 = vst [vmem:[%s184] sm:$0xff] %v268
        %s274 = scalar_lea.vmem %s184, 8 [#allocation3]
        %275 = vst [vmem:[%s274] sm:$0xff] %v272
        %s276 = sand.u32 %s68, 1
        %s277 = sand.u32 %s68, 1
        %s278 = smul.addr %s277, 16
        %s279 = scalar_lea.vmem [#allocation3], %s278
        // Predicated region
        $region70: #{_spectral_conv2d_forward.1} parent=64 // pred_check
          %p280 = pneg %p78
        $region71: #{_spectral_conv2d_forward.1} parent=64 // pred_check_branch
          %282 = sbr.rel (%p280) target = $region73
        $region72: #{_spectral_conv2d_forward.1} parent=64 // pred_region
          %s283 = smul.addr %s13, 8
          %s284 = scalar_lea.vmem %s2, %s283
          // Predicated region
          $region74: #{_spectral_conv2d_forward.1} parent=72 // pred_check
            _
          $region75: #{_spectral_conv2d_forward.1} parent=72 // pred_check_branch
            %286 = sbr.rel (0) target = $region77
          $region76: #{_spectral_conv2d_forward.1} parent=72 // pred_region
            // Predicated region
            $region78: #{_spectral_conv2d_forward.1} parent=76 // pred_check
              _
            $region79: #{_spectral_conv2d_forward.1} parent=76 // pred_check_branch
              %288 = sbr.rel (0) target = $region81
            $region80: #{_spectral_conv2d_forward.1} parent=76 // pred_region
              // Predicated region
              $region93: #{_spectral_conv2d_forward.1} parent=80 // pred_check
                _
              $region94: #{_spectral_conv2d_forward.1} parent=80 // pred_check_branch
                %306 = sbr.rel (0) target = $region96
              $region95: #{_spectral_conv2d_forward.1} parent=80 // pred_region
                loop: start=0, step=1, limit=1
                $region97: #{_spectral_conv2d_forward.1} parent=95 // loop_pre_header
                  _
                $region98: #{_spectral_conv2d_forward.1} parent=95 // loop_header
                  %s308 = sphi 0, %s312
                  %p309 = scmp.ge.s32.totalorder %s308, 1
                  %s313 = sphi %s279, %s279
                  %s314 = sphi %s284, %s284
                $region99: #{_spectral_conv2d_forward.1} parent=95 // loop_header_branch
                  %311 = sbr.rel (%p309) target = $region103
                $region100: #{_spectral_conv2d_forward.1} parent=95 // loop_body
                  %v315 = vld [vmem:[%s313] sm:$0xff]
                  %316 = vst [vmem:[%s314] sm:$0xff] %v315
                  %v317 = vld [vmem:[%s313 + $0x8] sm:$0xff]
                  %318 = vst [vmem:[%s314 + $0x10] sm:$0xff] %v317
                $region101: #{_spectral_conv2d_forward.1} parent=95 // loop_footer
                  %s312 = sadd.s32 1, %s308
                $region102: #{_spectral_conv2d_forward.1} parent=95 // loop_footer_branch
                  %307 = sbr.rel target = $region98
                $region103: #{_spectral_conv2d_forward.1} parent=95 // loop_exit
                  _
              $region96: #{_spectral_conv2d_forward.1} parent=80 // pred_fallthru
                _
              // Predicated region
              $region104: #{_spectral_conv2d_forward.1} parent=80 // pred_check
                _
              $region105: #{_spectral_conv2d_forward.1} parent=80 // pred_check_branch
                %320 = sbr.rel target = $region107
              $region106: #{_spectral_conv2d_forward.1} parent=80 // pred_region
                _
              $region107: #{_spectral_conv2d_forward.1} parent=80 // pred_fallthru
                _
            $region81: #{_spectral_conv2d_forward.1} parent=76 // pred_fallthru
              _
            // Predicated region
            $region82: #{_spectral_conv2d_forward.1} parent=76 // pred_check
              _
            $region83: #{_spectral_conv2d_forward.1} parent=76 // pred_check_branch
              %290 = sbr.rel target = $region85
            $region84: #{_spectral_conv2d_forward.1} parent=76 // pred_region
              %s292 = ssub.s32 256, 1
              loop: start=0, step=1, limit=1
              $region86: #{_spectral_conv2d_forward.1} parent=84 // loop_pre_header
                _
              $region87: #{_spectral_conv2d_forward.1} parent=84 // loop_header
                %s294 = sphi 0, %s298
                %p295 = scmp.ge.s32.totalorder %s294, 1
                %s299 = sphi %s279, %s279
                %s300 = sphi %s284, %s284
              $region88: #{_spectral_conv2d_forward.1} parent=84 // loop_header_branch
                %297 = sbr.rel (%p295) target = $region92
              $region89: #{_spectral_conv2d_forward.1} parent=84 // loop_body
                %v301 = vld [vmem:[%s299] sm:%s292]
                %302 = vst [vmem:[%s300] sm:%s292] %v301
                %v303 = vld [vmem:[%s299 + $0x8] sm:%s292]
                %304 = vst [vmem:[%s300 + $0x10] sm:%s292] %v303
              $region90: #{_spectral_conv2d_forward.1} parent=84 // loop_footer
                %s298 = sadd.s32 1, %s294
              $region91: #{_spectral_conv2d_forward.1} parent=84 // loop_footer_branch
                %293 = sbr.rel target = $region87
              $region92: #{_spectral_conv2d_forward.1} parent=84 // loop_exit
                _
            $region85: #{_spectral_conv2d_forward.1} parent=76 // pred_fallthru
              _
          $region77: #{_spectral_conv2d_forward.1} parent=72 // pred_fallthru
            _
          %321 = vnop
        $region73: #{_spectral_conv2d_forward.1} parent=64 // pred_fallthru
          _
      $region65: #{_spectral_conv2d_forward.1} parent=5 // pred_fallthru
        _
      %p322 = scmp.le.s32.totalorder 2, %s8
      // Predicated region
      $region108: #{_spectral_conv2d_forward.1} parent=5 // pred_check
        %p323 = pneg %p322
      $region109: #{_spectral_conv2d_forward.1} parent=5 // pred_check_branch
        %325 = sbr.rel (%p323) target = $region111
      $region110: #{_spectral_conv2d_forward.1} parent=5 // pred_region
        %s326 = ssub.s32 %s8, 2
        // Predicated region
        $region112: #{_spectral_conv2d_forward.1} parent=110 // pred_check
          %p327 = pneg %p84
        $region113: #{_spectral_conv2d_forward.1} parent=110 // pred_check_branch
          %329 = sbr.rel (%p327) target = $region115
        $region114: #{_spectral_conv2d_forward.1} parent=110 // pred_region
          %s330 = sand.u32 %s69, 1
          %s331 = sand.u32 %s69, 1
          %s332 = smul.addr %s331, 16
          %s333 = scalar_lea.vmem [#allocation3], %s332
        $region115: #{_spectral_conv2d_forward.1} parent=110 // pred_fallthru
          _
      $region111: #{_spectral_conv2d_forward.1} parent=5 // pred_fallthru
        _
    $region6: #{_spectral_conv2d_forward.1} parent=1 // loop_footer
      %s12 = sadd.s32 1, %s8
    $region7: #{_spectral_conv2d_forward.1} parent=1 // loop_footer_branch
      %7 = sbr.rel target = $region3
    $region8: #{_spectral_conv2d_forward.1} parent=1 // loop_exit
      _

</llo_original>
